<compile_context>
chip_gen: v5e
topology: v5e:2x2
jax: 0.10.0
libtpu: 0.0.40
codegen_flags: <defaults>
</compile_context>

<pallas_src>
import functools
from typing import NamedTuple

import jax
import jax.numpy as jnp
from jax.experimental import pallas as pl
from jax.experimental.pallas import tpu as pltpu


# --------------------------------------------------------------------------
# Helpers (tile / padding / VMEM sizing)
# --------------------------------------------------------------------------
def _round_up(x, m):
    return ((x + m - 1) // m) * m


def _chip_vmem_capacity():
    try:
        return int(pltpu.get_tpu_info().vmem_capacity_bytes)
    except Exception:
        return 64 * 1024 * 1024  # conservative (v7x-sized) fallback


def _choose_th(hid_128, th_req, cap):
    """Hidden-tile size (multiple of 128).

    Instead of rounding hidden up to a multiple of a fixed th (up to th-128
    zero columns of wasted MXU work / weight DMA), pick the th <= target that
    minimises hidden padding; prefer the largest such th (fewer grid steps).
    """
    if th_req is not None:
        th = max(128, _round_up(min(th_req, hid_128), 128))
        return th, _round_up(hid_128, th)
    target = 1024 if cap >= 100 * 1024 * 1024 else 512  # v5e/v6e vs v7x
    target = min(target, hid_128)
    best_th, best_pad = 128, _round_up(hid_128, 128)
    for cand in range(128, target + 1, 128):
        padded = _round_up(hid_128, cand)
        if padded < best_pad or (padded == best_pad and cand > best_th):
            best_th, best_pad = cand, padded
    return best_th, best_pad


def _vmem_usage_bytes(tm, th, in_p, out_p, esize, out_esize):
    return (2 * tm * in_p * esize            # x tile (double-buffered)
            + 2 * in_p * th * esize          # W1^T slice
            + 2 * th * out_p * esize         # W2^T slice
            + 2 * th * 4 + 2 * out_p * 4     # b1 slice / b2 (f32)
            + 2 * tm * out_p * out_esize     # output tile
            + tm * out_p * 4)                # f32 accumulator scratch


def _choose_tm(m, tm_req, cap, in_p, th, out_p, esize, out_esize):
    """M (token) tile: as large as VMEM allows, to amortise weight re-streams."""
    m16 = max(16, _round_up(m, 16))
    if tm_req is not None:
        tm = max(16, _round_up(min(tm_req, m16), 16))
    else:
        target = 1024 if cap >= 100 * 1024 * 1024 else 512  # v5e/v6e vs v7x
        tm = min(target, m16)
    budget = int(cap * 3 // 4 * 0.9)  # scoped limit with headroom
    while tm > 16 and _vmem_usage_bytes(tm, th, in_p, out_p,
                                        esize, out_esize) > budget:
        tm = max(16, _round_up(tm // 2, 16))
    return tm


# --------------------------------------------------------------------------
# Kernel
# --------------------------------------------------------------------------
def _fused_mlp_kernel(x_ref, w1t_ref, b1_ref, w2t_ref, b2_ref, o_ref, acc_ref):
    """One (M-tile, hidden-tile) step of y = sqrelu(x @ W1^T + b1) @ W2^T + b2.

    x_ref  : (tm, in_p)       token tile (same block across hidden axis)
    w1t_ref: (in_p, th)       hidden-slice of W1^T        (compute dtype)
    b1_ref : (1, th)          hidden-slice of b1          (f32)
    w2t_ref: (th, out_p)      hidden-slice of W2^T        (compute dtype)
    b2_ref : (1, out_p)       full b2                     (f32)
    o_ref  : (tm, out_p)      output tile (same block across hidden axis)
    acc_ref: (tm, out_p) f32  accumulator scratch
    """
    h_idx = pl.program_id(1)

    @pl.when(h_idx == 0)
    def _():
        # Fold b2 into the accumulator init: removes a (tm, out_p) zero-fill
        # and a (tm, out_p) f32 add from the epilogue.
        acc_ref[...] = jnp.broadcast_to(b2_ref[...], acc_ref.shape)

    # fc1 slice: (tm, th), f32 accumulation on the MXU.
    h = jnp.dot(x_ref[...], w1t_ref[...], preferred_element_type=jnp.float32)
    h = h + b1_ref[...]  # b1 pre-cast to f32 in the wrapper

    # Squared ReLU in f32 (VPU work hides under the MXU); downcast for fc2.
    a = jnp.maximum(h, 0.0)
    a = a * a

    acc_ref[...] += jnp.dot(a.astype(w2t_ref.dtype), w2t_ref[...],
                            preferred_element_type=jnp.float32)

    @pl.when(h_idx == pl.num_programs(1) - 1)
    def _():
        o_ref[...] = acc_ref[...].astype(o_ref.dtype)


# --------------------------------------------------------------------------
# Wrappers
# --------------------------------------------------------------------------
class MLPMeta(NamedTuple):
    in_features: int
    hidden_features: int
    out_features: int
    in_p: int
    hid_p: int
    out_p: int
    th: int


def prepare_fused_dense_params(w1, b1, w2, b2, *,
                               compute_dtype=jnp.bfloat16, th=None):
    """Transpose / pad / cast the weights ONCE (hoisted out of the hot path).

    Returns ((w1t, b1p, w2t, b2p), meta) for fused_dense_sqrelu_dense_prepared.
    """
    hidden_features, in_features = w1.shape
    out_features, hidden2 = w2.shape
    assert hidden2 == hidden_features

    cap = _chip_vmem_capacity()
    in_p = _round_up(in_features, 128)
    out_p = _round_up(out_features, 128)
    hid_128 = _round_up(hidden_features, 128)
    th_final, hid_p = _choose_th(hid_128, th, cap)

    cdt = jnp.dtype(compute_dtype)
    # TODO(synk): on v7x an fp8 weight path (compute_dtype=float8_e4m3fn for
    # W1^T/W2^T) would halve weight HBM bytes; left as an explicit opt-in.
    w1t = jnp.pad(w1.T, ((0, in_p - in_features),
                         (0, hid_p - hidden_features))).astype(cdt)
    w2t = jnp.pad(w2.T, ((0, hid_p - hidden_features),
                         (0, out_p - out_features))).astype(cdt)
    b1p = jnp.pad(b1.astype(jnp.float32),
                  (0, hid_p - hidden_features)).reshape(1, hid_p)
    b2p = jnp.pad(b2.astype(jnp.float32),
                  (0, out_p - out_features)).reshape(1, out_p)

    meta = MLPMeta(in_features, hidden_features, out_features,
                   in_p, hid_p, out_p, th_final)
    return (w1t, b1p, w2t, b2p), meta


@functools.partial(jax.jit, static_argnames=("meta", "tm"))
def fused_dense_sqrelu_dense_prepared(x, w1t, b1p, w2t, b2p, *, meta, tm=None):
    """Production path: weights already transposed / padded / cast."""
    *batch_dims, in_features = x.shape
    assert in_features == meta.in_features
    out_dtype = x.dtype

    x2d = x.reshape(-1, in_features)
    m = x2d.shape[0]

    cap = _chip_vmem_capacity()
    esize = jnp.dtype(w1t.dtype).itemsize
    out_esize = jnp.dtype(out_dtype).itemsize
    tm_final = _choose_tm(m, tm, cap, meta.in_p, meta.th, meta.out_p,
                          esize, out_esize)

    m_p = _round_up(m, tm_final)
    x2d = jnp.pad(x2d, ((0, m_p - m),
                        (0, meta.in_p - in_features))).astype(w1t.dtype)

    grid = (m_p // tm_final, meta.hid_p // meta.th)

    # Weights are re-streamed from HBM once per M tile (their index_maps depend
    # only on h), so count them grid[0] times in the advisory cost estimate.
    cost = pl.CostEstimate(
        flops=2 * m_p * (meta.in_p * meta.hid_p + meta.hid_p * meta.out_p),
        transcendentals=0,
        bytes_accessed=(x2d.size * esize
                        + (w1t.size + w2t.size) * esize * grid[0]
                        + b1p.size * 4 + b2p.size * 4
                        + m_p * meta.out_p * out_esize),
    )

    out2d = pl.pallas_call(
        _fused_mlp_kernel,
        out_shape=jax.ShapeDtypeStruct((m_p, meta.out_p), out_dtype),
        grid_spec=pltpu.PrefetchScalarGridSpec(
            num_scalar_prefetch=0,
            grid=grid,
            in_specs=[
                pl.BlockSpec((tm_final, meta.in_p), lambda i, h: (i, 0)),   # x
                pl.BlockSpec((meta.in_p, meta.th), lambda i, h: (0, h)),    # W1^T
                pl.BlockSpec((1, meta.th), lambda i, h: (0, h)),            # b1
                pl.BlockSpec((meta.th, meta.out_p), lambda i, h: (h, 0)),   # W2^T
                pl.BlockSpec((1, meta.out_p), lambda i, h: (0, 0)),         # b2
            ],
            out_specs=pl.BlockSpec((tm_final, meta.out_p), lambda i, h: (i, 0)),
            scratch_shapes=[pltpu.VMEM((tm_final, meta.out_p), jnp.float32)],
        ),
        compiler_params=pltpu.CompilerParams(
            # TODO(synk): consider pltpu.CORE_PARALLEL on v7x once m_p/tm >= 2.
            dimension_semantics=("parallel", "arbitrary"),
            vmem_limit_bytes=cap * 3 // 4,
        ),
        cost_estimate=cost,
    )(x2d, w1t, b1p, w2t, b2p)

    out2d = out2d[:m, :meta.out_features]
    return out2d.reshape(*batch_dims, meta.out_features)


def fused_dense_sqrelu_dense(x, w1, b1, w2, b2, *,
                             compute_dtype=jnp.bfloat16, tm=None, th=None):
    """Convenience path (re-preps weights each call).

    Production callers should call prepare_fused_dense_params(...) once and
    reuse the result with fused_dense_sqrelu_dense_prepared(...).
    """
    params, meta = prepare_fused_dense_params(
        w1, b1, w2, b2, compute_dtype=compute_dtype, th=th)
    return fused_dense_sqrelu_dense_prepared(x, *params, meta=meta, tm=tm)


def _reference(x, w1, b1, w2, b2):
    h = x @ w1.T + b1
    a = jnp.maximum(h, 0.0) ** 2
    return a @ w2.T + b2


if __name__ == "__main__":
    # Small shapes consistent with the module: tokens = batch * seq.
    batch, seq = 2, 8
    in_features = 32
    hidden_features = 64
    out_features = 32

    key = jax.random.PRNGKey(0)
    kx, kw1, kb1, kw2, kb2 = jax.random.split(key, 5)

    x = jax.random.normal(kx, (batch, seq, in_features), dtype=jnp.float32)
    w1 = jax.random.normal(kw1, (hidden_features, in_features), jnp.float32) * 0.05
    b1 = jax.random.normal(kb1, (hidden_features,), jnp.float32) * 0.05
    w2 = jax.random.normal(kw2, (out_features, hidden_features), jnp.float32) * 0.05
    b2 = jax.random.normal(kb2, (out_features,), jnp.float32) * 0.05

    ref = _reference(x, w1, b1, w2, b2)

    # Exact path (f32 matmuls) -- numerically matches the module.
    out_f32 = fused_dense_sqrelu_dense(x, w1, b1, w2, b2,
                                       compute_dtype=jnp.float32)
    out_f32 = jax.block_until_ready(out_f32)
    assert out_f32.shape == (batch, seq, out_features), out_f32.shape
    assert jnp.allclose(out_f32, ref, atol=1e-4, rtol=1e-4), (
        float(jnp.max(jnp.abs(out_f32 - ref))))

    # Production default: prepare weights once, bf16 matmuls, f32 accumulation.
    params, meta = prepare_fused_dense_params(w1, b1, w2, b2)
    out_bf16 = fused_dense_sqrelu_dense_prepared(x, *params, meta=meta)
    out_bf16 = jax.block_until_ready(out_bf16)
    assert out_bf16.shape == (batch, seq, out_features), out_bf16.shape
    assert jnp.allclose(out_bf16, ref, atol=5e-2, rtol=5e-2), (
        float(jnp.max(jnp.abs(out_bf16 - ref))))

    print("KERNEL_OK")
</pallas_src>

<mosaic_0001>
module attributes {stable_mosaic.version = 11 : i64} {
  func.func @_fused_mlp_kernel(%arg0: i32, %arg1: i32, %arg2: memref<16x128xf32, #tpu.memory_space<vmem>>, %arg3: memref<128x128xf32, #tpu.memory_space<vmem>>, %arg4: memref<1x128xf32, #tpu.memory_space<vmem>>, %arg5: memref<128x128xf32, #tpu.memory_space<vmem>>, %arg6: memref<1x128xf32, #tpu.memory_space<vmem>>, %arg7: memref<16x128xf32, #tpu.memory_space<vmem>>, %arg8: memref<16x128xf32, #tpu.memory_space<vmem>>) attributes {dimension_semantics = [#tpu.dimension_semantics<parallel>, #tpu.dimension_semantics<arbitrary>], iteration_bounds = array<i64: 1, 1>, scalar_prefetch = 0 : i64, scratch_operands = 1 : i64, tpu.core_type = #tpu.core_type<tc>, window_params = [{transform_indices = @transform_0, window_bounds = array<i64: 16, 128>}, {transform_indices = @transform_1, window_bounds = array<i64: 128, 128>}, {transform_indices = @transform_2, window_bounds = array<i64: 1, 128>}, {transform_indices = @transform_3, window_bounds = array<i64: 128, 128>}, {pipeline_mode = #tpu.pipeline_mode<synchronous>, transform_indices = @transform_4, window_bounds = array<i64: 1, 128>}, {transform_indices = @transform_5, window_bounds = array<i64: 16, 128>}]} {
    %c0_i32 = arith.constant 0 : i32
    %0 = arith.cmpi eq, %arg1, %c0_i32 : i32
    %1 = arith.extui %0 : i1 to i32
    %c0_i32_0 = arith.constant 0 : i32
    %2 = arith.cmpi ne, %1, %c0_i32_0 : i32
    scf.if %2 {
      %c0_16 = arith.constant 0 : index
      %c0_17 = arith.constant 0 : index
      %20 = vector.load %arg6[%c0_16, %c0_17] : memref<1x128xf32, #tpu.memory_space<vmem>>, vector<1x128xf32>
      %21 = vector.shape_cast %20 : vector<1x128xf32> to vector<1x128xf32>
      %22 = vector.broadcast %21 : vector<1x128xf32> to vector<16x128xf32>
      %c0_18 = arith.constant 0 : index
      %c0_19 = arith.constant 0 : index
      %23 = vector.load %arg8[%c0_18, %c0_19] : memref<16x128xf32, #tpu.memory_space<vmem>>, vector<16x128xf32>
      tpu.vector_store %arg8[%c0_18, %c0_19], %22 {strides = array<i32>} : memref<16x128xf32, #tpu.memory_space<vmem>>, vector<16x128xf32>,
    } else {
    }
    %c0 = arith.constant 0 : index
    %c0_1 = arith.constant 0 : index
    %3 = vector.load %arg2[%c0, %c0_1] : memref<16x128xf32, #tpu.memory_space<vmem>>, vector<16x128xf32>
    %c0_2 = arith.constant 0 : index
    %c0_3 = arith.constant 0 : index
    %4 = vector.load %arg3[%c0_2, %c0_3] : memref<128x128xf32, #tpu.memory_space<vmem>>, vector<128x128xf32>
    %cst = arith.constant dense<0.000000e+00> : vector<16x128xf32>
    %5 = tpu.matmul %3, %4, %cst {dimension_numbers = #tpu.dot_dimension_numbers<[1], [0], [0], [1], [0, 0, 1, 1], [], []>} : vector<16x128xf32>, vector<128x128xf32>, vector<16x128xf32> -> vector<16x128xf32>
    %c0_4 = arith.constant 0 : index
    %c0_5 = arith.constant 0 : index
    %6 = vector.load %arg4[%c0_4, %c0_5] : memref<1x128xf32, #tpu.memory_space<vmem>>, vector<1x128xf32>
    %7 = vector.broadcast %6 : vector<1x128xf32> to vector<16x128xf32>
    %8 = arith.addf %5, %7 : vector<16x128xf32>
    %cst_6 = arith.constant 0.000000e+00 : f32
    %9 = vector.broadcast %cst_6 : f32 to vector<16x128xf32>
    %10 = arith.maximumf %8, %9 : vector<16x128xf32>
    %11 = arith.mulf %10, %10 : vector<16x128xf32>
    %c0_7 = arith.constant 0 : index
    %c0_8 = arith.constant 0 : index
    %12 = vector.load %arg8[%c0_7, %c0_8] : memref<16x128xf32, #tpu.memory_space<vmem>>, vector<16x128xf32>
    %c0_9 = arith.constant 0 : index
    %c0_10 = arith.constant 0 : index
    %13 = vector.load %arg5[%c0_9, %c0_10] : memref<128x128xf32, #tpu.memory_space<vmem>>, vector<128x128xf32>
    %cst_11 = arith.constant dense<0.000000e+00> : vector<16x128xf32>
    %14 = tpu.matmul %11, %13, %cst_11 {dimension_numbers = #tpu.dot_dimension_numbers<[1], [0], [0], [1], [0, 0, 1, 1], [], []>} : vector<16x128xf32>, vector<128x128xf32>, vector<16x128xf32> -> vector<16x128xf32>
    %15 = arith.addf %12, %14 : vector<16x128xf32>
    %c0_12 = arith.constant 0 : index
    %c0_13 = arith.constant 0 : index
    %16 = vector.load %arg8[%c0_12, %c0_13] : memref<16x128xf32, #tpu.memory_space<vmem>>, vector<16x128xf32>
    tpu.vector_store %arg8[%c0_12, %c0_13], %15 {strides = array<i32>} : memref<16x128xf32, #tpu.memory_space<vmem>>, vector<16x128xf32>,
    %c0_i32_14 = arith.constant 0 : i32
    %17 = arith.cmpi eq, %arg1, %c0_i32_14 : i32
    %18 = arith.extui %17 : i1 to i32
    %c0_i32_15 = arith.constant 0 : i32
    %19 = arith.cmpi ne, %18, %c0_i32_15 : i32
    scf.if %19 {
      %c0_16 = arith.constant 0 : index
      %c0_17 = arith.constant 0 : index
      %20 = vector.load %arg8[%c0_16, %c0_17] : memref<16x128xf32, #tpu.memory_space<vmem>>, vector<16x128xf32>
      %c0_18 = arith.constant 0 : index
      %c0_19 = arith.constant 0 : index
      %21 = vector.load %arg7[%c0_18, %c0_19] : memref<16x128xf32, #tpu.memory_space<vmem>>, vector<16x128xf32>
      tpu.vector_store %arg7[%c0_18, %c0_19], %20 {strides = array<i32>} : memref<16x128xf32, #tpu.memory_space<vmem>>, vector<16x128xf32>,
    } else {
    }
    return
  }
  func.func @transform_0(%arg0: i32, %arg1: i32) -> (i32, i32) {
    %c0_i32 = arith.constant 0 : i32
    %c0_i32_0 = arith.constant 0 : i32
    return %arg0, %c0_i32 : i32, i32
  }
  func.func @transform_1(%arg0: i32, %arg1: i32) -> (i32, i32) {
    %c0_i32 = arith.constant 0 : i32
    %c0_i32_0 = arith.constant 0 : i32
    return %c0_i32, %arg1 : i32, i32
  }
  func.func @transform_2(%arg0: i32, %arg1: i32) -> (i32, i32) {
    %c0_i32 = arith.constant 0 : i32
    %c0_i32_0 = arith.constant 0 : i32
    return %c0_i32, %arg1 : i32, i32
  }
  func.func @transform_3(%arg0: i32, %arg1: i32) -> (i32, i32) {
    %c0_i32 = arith.constant 0 : i32
    %c0_i32_0 = arith.constant 0 : i32
    return %arg1, %c0_i32 : i32, i32
  }
  func.func @transform_4(%arg0: i32, %arg1: i32) -> (i32, i32) {
    %c0_i32 = arith.constant 0 : i32
    %c0_i32_0 = arith.constant 0 : i32
    %c0_i32_1 = arith.constant 0 : i32
    return %c0_i32, %c0_i32_0 : i32, i32
  }
  func.func @transform_5(%arg0: i32, %arg1: i32) -> (i32, i32) {
    %c0_i32 = arith.constant 0 : i32
    %c0_i32_0 = arith.constant 0 : i32
    return %arg0, %c0_i32 : i32, i32
  }
}

</mosaic_0001>

<llo_original>
// kernel: fused_dense_sqrelu_dense_prepared.1
$region0: #{fused_dense_sqrelu_dense_prepared.1}
  #allocation0 [shape = 'u32[]', space=smem, size = 0x4, offset = 0x4, fixed_abs, tag = 'smem constant byte address 0x4 - core index']
  #allocation1 [shape = 'u32[72,128]{1,0:T(1,128)}', space=vmem, size = 0x9000, scoped, tag = 'internal scratch']
  #allocation2 [shape = 'f32[16,128]{1,0:T(8,128)}', space=vmem, size = 0x2000, scoped, tag = 'scratch operand']
  %s0 = inlined_call_operand.vmem [shape: f32[16,128], index: 0, kind: input, shape index: {}]
  %s1 = inlined_call_operand.hbm [shape: f32[128,128], index: 1, kind: input, shape index: {}]
  %s2 = inlined_call_operand.vmem [shape: f32[1,128], index: 2, kind: input, shape index: {}]
  %s3 = inlined_call_operand.hbm [shape: f32[128,128], index: 3, kind: input, shape index: {}]
  %s4 = inlined_call_operand.vmem [shape: f32[1,128], index: 4, kind: input, shape index: {}]
  %s5 = inlined_call_operand.vmem [shape: f32[16,128], index: 5, kind: output, shape index: {}]
  %s6 = sld [smem:[#allocation0]]
  $region46: #{fused_dense_sqrelu_dense_prepared.1} parent=0
    _
  %s8 = ssub.s32 1, %s6
  %s9 = scalar_select 0, %s8, %s6
  $region1: #{fused_dense_sqrelu_dense_prepared.1} parent=0
    #allocation3 [shape = 'u8[65536]{0}', space=vmem, size = 0x10000, scoped, tag = 'input window, operand 1, single buffered']
    #allocation4 [shape = 's32[1]{0}', space=sflag, size = 0x4, scoped, tag = 'scoped memory for fused_dense_sqrelu_dense_prepared.1']
    #allocation5 [shape = 'u8[65536]{0}', space=vmem, size = 0x10000, scoped, tag = 'input window, operand 3, single buffered']
    #allocation6 [shape = 's32[1]{0}', space=sflag, size = 0x4, scoped, tag = 'scoped memory for fused_dense_sqrelu_dense_prepared.1']
    %10 = vsyncpa [#allocation4], 0
    %11 = vsyncpa [#allocation6], 0
    // Predicated region
    $region2: #{fused_dense_sqrelu_dense_prepared.1} parent=1 // pred_check
      _
    $region3: #{fused_dense_sqrelu_dense_prepared.1} parent=1 // pred_check_branch
      %13 = sbr.rel (0) target = $region5
    $region4: #{fused_dense_sqrelu_dense_prepared.1} parent=1 // pred_region
      _
    $region5: #{fused_dense_sqrelu_dense_prepared.1} parent=1 // pred_fallthru
      _
    // Predicated region
    $region6: #{fused_dense_sqrelu_dense_prepared.1} parent=1 // pred_check
      _
    $region7: #{fused_dense_sqrelu_dense_prepared.1} parent=1 // pred_check_branch
      %15 = sbr.rel (0) target = $region9
    $region8: #{fused_dense_sqrelu_dense_prepared.1} parent=1 // pred_region
      %17 = vsyncadd [#allocation4], 0
      %s18 = sshll.u32 %s1, 4
      %s19 = int_to_ptr.hbm [resolvable:$true] %s18
      %s20 = sshll.u32 [#allocation3], 4
      %s21 = int_to_ptr.vmem [resolvable:$true] %s20
      %26 = dma.hbm_to_vmem [thread:$0]  %s19, 2048, %s21, [#allocation4], 128, 128, 8
    $region9: #{fused_dense_sqrelu_dense_prepared.1} parent=1 // pred_fallthru
      _
    // Predicated region
    $region10: #{fused_dense_sqrelu_dense_prepared.1} parent=1 // pred_check
      _
    $region11: #{fused_dense_sqrelu_dense_prepared.1} parent=1 // pred_check_branch
      %28 = sbr.rel (0) target = $region13
    $region12: #{fused_dense_sqrelu_dense_prepared.1} parent=1 // pred_region
      _
    $region13: #{fused_dense_sqrelu_dense_prepared.1} parent=1 // pred_fallthru
      _
    // Predicated region
    $region14: #{fused_dense_sqrelu_dense_prepared.1} parent=1 // pred_check
      _
    $region15: #{fused_dense_sqrelu_dense_prepared.1} parent=1 // pred_check_branch
      %30 = sbr.rel (0) target = $region17
    $region16: #{fused_dense_sqrelu_dense_prepared.1} parent=1 // pred_region
      %32 = vsyncadd [#allocation6], 0
      %s33 = sshll.u32 %s3, 4
      %s34 = int_to_ptr.hbm [resolvable:$true] %s33
      %s35 = sshll.u32 [#allocation5], 4
      %s36 = int_to_ptr.vmem [resolvable:$true] %s35
      %41 = dma.hbm_to_vmem [thread:$0]  %s34, 2048, %s36, [#allocation6], 128, 128, 8
    $region17: #{fused_dense_sqrelu_dense_prepared.1} parent=1 // pred_fallthru
      _
    // Predicated region
    $region18: #{fused_dense_sqrelu_dense_prepared.1} parent=1 // pred_check
      _
    $region19: #{fused_dense_sqrelu_dense_prepared.1} parent=1 // pred_check_branch
      %43 = sbr.rel (0) target = $region21
    $region20: #{fused_dense_sqrelu_dense_prepared.1} parent=1 // pred_region
      _
    $region21: #{fused_dense_sqrelu_dense_prepared.1} parent=1 // pred_fallthru
      _
    // Predicated region
    $region22: #{fused_dense_sqrelu_dense_prepared.1} parent=1 // pred_check
      _
    $region23: #{fused_dense_sqrelu_dense_prepared.1} parent=1 // pred_check_branch
      %45 = sbr.rel (0) target = $region25
    $region24: #{fused_dense_sqrelu_dense_prepared.1} parent=1 // pred_region
      %47 = dma.done [#allocation4], 2048
    $region25: #{fused_dense_sqrelu_dense_prepared.1} parent=1 // pred_fallthru
      _
    // Predicated region
    $region26: #{fused_dense_sqrelu_dense_prepared.1} parent=1 // pred_check
      _
    $region27: #{fused_dense_sqrelu_dense_prepared.1} parent=1 // pred_check_branch
      %49 = sbr.rel (0) target = $region29
    $region28: #{fused_dense_sqrelu_dense_prepared.1} parent=1 // pred_region
      %51 = dma.done [#allocation6], 2048
    $region29: #{fused_dense_sqrelu_dense_prepared.1} parent=1 // pred_fallthru
      _
    %p52 = scmp.eq.s32.totalorder 0, 0
    // Predicated region
    $region30: #{fused_dense_sqrelu_dense_prepared.1} parent=1 // pred_check
      %p53 = pneg %p52
    $region31: #{fused_dense_sqrelu_dense_prepared.1} parent=1 // pred_check_branch
      %55 = sbr.rel (%p53) target = $region33
    $region32: #{fused_dense_sqrelu_dense_prepared.1} parent=1 // pred_region
      %v56 = vld [vmem:[%s4] sm:$0x1]
      %v58 = vperm.slane %v56, 0
      %60 = vst [vmem:[#allocation2] sm:$0xff] %v58
      %61 = vst [vmem:[#allocation2 + $0x8] sm:$0xff] %v58
    $region33: #{fused_dense_sqrelu_dense_prepared.1} parent=1 // pred_fallthru
      _
    %v62 = vld [vmem:[%s0] sm:$0xff]
    %v63 = vld [vmem:[%s0 + $0x8] sm:$0xff]
    %v64 = vld [vmem:[#allocation3] sm:$0xff]
    %v65 = vld [vmem:[#allocation3 + $0x8] sm:$0xff]
    %v66 = vld [vmem:[#allocation3 + $0x10] sm:$0xff]
    %v67 = vld [vmem:[#allocation3 + $0x18] sm:$0xff]
    %v68 = vld [vmem:[#allocation3 + $0x20] sm:$0xff]
    %v69 = vld [vmem:[#allocation3 + $0x28] sm:$0xff]
    %v70 = vld [vmem:[#allocation3 + $0x30] sm:$0xff]
    %v71 = vld [vmem:[#allocation3 + $0x38] sm:$0xff]
    %v72 = vld [vmem:[#allocation3 + $0x40] sm:$0xff]
    %v73 = vld [vmem:[#allocation3 + $0x48] sm:$0xff]
    %v74 = vld [vmem:[#allocation3 + $0x50] sm:$0xff]
    %v75 = vld [vmem:[#allocation3 + $0x58] sm:$0xff]
    %v76 = vld [vmem:[#allocation3 + $0x60] sm:$0xff]
    %v77 = vld [vmem:[#allocation3 + $0x68] sm:$0xff]
    %v78 = vld [vmem:[#allocation3 + $0x70] sm:$0xff]
    %v79 = vld [vmem:[#allocation3 + $0x78] sm:$0xff]
    %v80 = vld [vmem:[%s2] sm:$0x1]
    %v82 = vperm.slane %v80, 0
    %84 = vmatpush.msra.mxu0 %v79
    %85 = vmatpush.msra.mxu0 %v78
    %86 = vmatpush.msra.mxu0 %v77
    %87 = vmatpush.msra.mxu0 %v76
    %88 = vmatpush.msra.mxu0 %v75
    %89 = vmatpush.msra.mxu0 %v74
    %90 = vmatpush.msra.mxu0 %v73
    %91 = vmatpush.msra.mxu0 %v72
    %92 = vmatpush.msra.mxu0 %v71
    %93 = vmatpush.msra.mxu0 %v70
    %94 = vmatpush.msra.mxu0 %v69
    %95 = vmatpush.msra.mxu0 %v68
    %96 = vmatpush.msra.mxu0 %v67
    %97 = vmatpush.msra.mxu0 %v66
    %98 = vmatpush.msra.mxu0 %v65
    %99 = vmatpush.msra.mxu0 %v64
    %100 = vmatmul.f32.gmra.mxu0 %v62
    %v101 = vpop.f32.mrf.mxu0
    %v102 = vadd.f32 %v82, %v101
    %103 = vmatmul.f32.gmra.mxu0 %v63
    %v104 = vpop.f32.mrf.mxu0
    %v105 = vadd.f32 %v82, %v104
    %106 = vdwg.mxu0
    %v107 = vmax.f32 %v102, 0.0
    %v108 = vmax.f32 %v105, 0.0
    %v109 = vmul.f32 %v107, %v107
    %v110 = vmul.f32 %v108, %v108
    %v111 = vld [vmem:[#allocation2] sm:$0xff]
    %v112 = vld [vmem:[#allocation2 + $0x8] sm:$0xff]
    %v113 = vld [vmem:[#allocation5] sm:$0xff]
    %v114 = vld [vmem:[#allocation5 + $0x8] sm:$0xff]
    %v115 = vld [vmem:[#allocation5 + $0x10] sm:$0xff]
    %v116 = vld [vmem:[#allocation5 + $0x18] sm:$0xff]
    %v117 = vld [vmem:[#allocation5 + $0x20] sm:$0xff]
    %v118 = vld [vmem:[#allocation5 + $0x28] sm:$0xff]
    %v119 = vld [vmem:[#allocation5 + $0x30] sm:$0xff]
    %v120 = vld [vmem:[#allocation5 + $0x38] sm:$0xff]
    %v121 = vld [vmem:[#allocation5 + $0x40] sm:$0xff]
    %v122 = vld [vmem:[#allocation5 + $0x48] sm:$0xff]
    %v123 = vld [vmem:[#allocation5 + $0x50] sm:$0xff]
    %v124 = vld [vmem:[#allocation5 + $0x58] sm:$0xff]
    %v125 = vld [vmem:[#allocation5 + $0x60] sm:$0xff]
    %v126 = vld [vmem:[#allocation5 + $0x68] sm:$0xff]
    %v127 = vld [vmem:[#allocation5 + $0x70] sm:$0xff]
    %v128 = vld [vmem:[#allocation5 + $0x78] sm:$0xff]
    %129 = vmatpush.msra.mxu0 %v128
    %130 = vmatpush.msra.mxu0 %v127
    %131 = vmatpush.msra.mxu0 %v126
    %132 = vmatpush.msra.mxu0 %v125
    %133 = vmatpush.msra.mxu0 %v124
    %134 = vmatpush.msra.mxu0 %v123
    %135 = vmatpush.msra.mxu0 %v122
    %136 = vmatpush.msra.mxu0 %v121
    %137 = vmatpush.msra.mxu0 %v120
    %138 = vmatpush.msra.mxu0 %v119
    %139 = vmatpush.msra.mxu0 %v118
    %140 = vmatpush.msra.mxu0 %v117
    %141 = vmatpush.msra.mxu0 %v116
    %142 = vmatpush.msra.mxu0 %v115
    %143 = vmatpush.msra.mxu0 %v114
    %144 = vmatpush.msra.mxu0 %v113
    %145 = vmatmul.f32.gmra.mxu0 %v109
    %v146 = vpop.f32.mrf.mxu0
    %v147 = vadd.f32 0.0, %v146
    %148 = vmatmul.f32.gmra.mxu0 %v110
    %v149 = vpop.f32.mrf.mxu0
    %v150 = vadd.f32 0.0, %v149
    %151 = vdwg.mxu0
    %v152 = vadd.f32 %v111, %v147
    %v153 = vadd.f32 %v112, %v150
    %154 = vst [vmem:[#allocation2] sm:$0xff] %v152
    %155 = vst [vmem:[#allocation2 + $0x8] sm:$0xff] %v153
    // Predicated region
    $region34: #{fused_dense_sqrelu_dense_prepared.1} parent=1 // pred_check
      %p156 = pneg %p52
    $region35: #{fused_dense_sqrelu_dense_prepared.1} parent=1 // pred_check_branch
      %158 = sbr.rel (%p156) target = $region37
    $region36: #{fused_dense_sqrelu_dense_prepared.1} parent=1 // pred_region
      %v159 = vld [vmem:[#allocation2] sm:$0xff]
      %v160 = vld [vmem:[#allocation2 + $0x8] sm:$0xff]
      %161 = vst [vmem:[%s5] sm:$0xff] %v159
      %162 = vst [vmem:[%s5 + $0x8] sm:$0xff] %v160
    $region37: #{fused_dense_sqrelu_dense_prepared.1} parent=1 // pred_fallthru
      _
    // Predicated region
    $region38: #{fused_dense_sqrelu_dense_prepared.1} parent=1 // pred_check
      _
    $region39: #{fused_dense_sqrelu_dense_prepared.1} parent=1 // pred_check_branch
      %164 = sbr.rel (0) target = $region41
    $region40: #{fused_dense_sqrelu_dense_prepared.1} parent=1 // pred_region
      _
    $region41: #{fused_dense_sqrelu_dense_prepared.1} parent=1 // pred_fallthru
      _
    // Predicated region
    $region42: #{fused_dense_sqrelu_dense_prepared.1} parent=1 // pred_check
      _
    $region43: #{fused_dense_sqrelu_dense_prepared.1} parent=1 // pred_check_branch
      %166 = sbr.rel (0) target = $region45
    $region44: #{fused_dense_sqrelu_dense_prepared.1} parent=1 // pred_region
      _
    $region45: #{fused_dense_sqrelu_dense_prepared.1} parent=1 // pred_fallthru
      _
    %167 = vsyncpa [#allocation4], 1
    %168 = vsyncpa [#allocation6], 1

</llo_original>
